<compile_context>
chip_gen: v7x
topology: tpu7x:2x2x1
jax: 0.10.0
libtpu: 0.0.40
codegen_flags: <defaults>
</compile_context>

<pallas_src>
import functools

import jax
import jax.numpy as jnp
from jax.experimental import pallas as pl
from jax.experimental.pallas import tpu as pltpu

BN_EPSILON = 0.001


def _round_up(x, m):
    return (x + m - 1) // m * m


def _conv_bn_hswish_kernel(p_ref, w_ref, gamma_ref, beta_ref, out_ref,
                           sum_ref, sumsq_ref, *, m_total, eps):
    """Two-phase fused kernel; grid = (phase, M tiles).

    p_ref:     (K, TM)    bf16  im2col patch columns for this tile
    w_ref:     (Cout, K)  bf16  conv weights (constant block, stays resident)
    gamma_ref: (Cout, 1)  f32   BN affine weight
    beta_ref:  (Cout, 1)  f32   BN affine bias
    out_ref:   (Cout, TM) f32   fused output tile (lane-dense minor axis)
    sum_ref / sumsq_ref: (Cout, 1) f32 VMEM scratch, persist across the grid.
    """
    phase = pl.program_id(0)
    tile = pl.program_id(1)

    # Single im2col matmul on the MXU: bf16 operands, f32 accumulation.
    conv = jnp.dot(w_ref[...], p_ref[...],
                   preferred_element_type=jnp.float32)        # (Cout, TM) f32

    @pl.when(jnp.logical_and(phase == 0, tile == 0))
    def _init_stats():
        sum_ref[...] = jnp.zeros_like(sum_ref)
        sumsq_ref[...] = jnp.zeros_like(sumsq_ref)

    @pl.when(phase == 0)
    def _accumulate_stats():
        sum_ref[...] += jnp.sum(conv, axis=1, keepdims=True)
        sumsq_ref[...] += jnp.sum(conv * conv, axis=1, keepdims=True)
        # Keep the output buffer defined; phase 1 revisits and overwrites it.
        out_ref[...] = conv

    @pl.when(phase == 1)
    def _normalize_activate():
        inv_m = 1.0 / m_total                                  # true count, not padded
        mean = sum_ref[...] * inv_m                            # (Cout, 1)
        var = sumsq_ref[...] * inv_m - mean * mean             # biased variance
        inv_std = jax.lax.rsqrt(var + eps)
        scale = gamma_ref[...] * inv_std
        shift = beta_ref[...] - mean * scale
        y = conv * scale + shift                               # BatchNorm (f32)
        y = y * jnp.clip(y + 3.0, 0.0, 6.0) * (1.0 / 6.0)      # HSwish
        out_ref[...] = y.astype(out_ref.dtype)


def conv_bn_swish(x_nchw, weight_oihw, gamma, beta, *, stride, padding,
                  eps=BN_EPSILON, block_cols=512):
    """Forward of ConvBNSwish. Input/output are NCHW float32."""
    n, cin, h, w = x_nchw.shape
    cout, cin_w, kh, kw = weight_oihw.shape
    assert cin == cin_w
    assert block_cols % 128 == 0

    ho = (h + 2 * padding - kh) // stride + 1
    wo = (w + 2 * padding - kw) // stride + 1
    m = n * ho * wo
    k = kh * kw * cin

    tm = min(block_cols, _round_up(m, 128))      # lane-aligned tile width
    m_pad = _round_up(m, tm)
    num_tiles = m_pad // tm

    # ---- wrapper glue (XLA, data movement only): transposed im2col ---------
    # TODO(synk): build the im2col windows in-kernel from overlapping input
    # blocks to avoid the KH*KW-fold HBM blow-up of the patch buffer.
    x_pad = jnp.pad(x_nchw.astype(jnp.float32),
                    ((0, 0), (0, 0), (padding, padding), (padding, padding)))
    cols = []
    for dh in range(kh):
        for dw in range(kw):
            sl = jax.lax.slice(
                x_pad,
                (0, 0, dh, dw),
                (n, cin, dh + (ho - 1) * stride + 1, dw + (wo - 1) * stride + 1),
                (1, 1, stride, stride))                        # (N, Cin, Ho, Wo)
            cols.append(jnp.transpose(sl, (1, 0, 2, 3)).reshape(cin, m))
    patches_t = jnp.concatenate(cols, axis=0)                  # (K, M), k=(dh,dw,c)
    patches_t = jnp.pad(patches_t, ((0, 0), (0, m_pad - m)))   # zero tail cols
    patches_t = patches_t.astype(jnp.bfloat16)                 # MXU operand dtype

    # Weights -> (Cout, K) with matching k = (dh, dw, c) ordering; bf16 for MXU.
    w_t = jnp.transpose(weight_oihw, (0, 2, 3, 1)).reshape(cout, k)
    w_t = w_t.astype(jnp.bfloat16)
    gamma2 = gamma.reshape(cout, 1).astype(jnp.float32)
    beta2 = beta.reshape(cout, 1).astype(jnp.float32)

    kernel = functools.partial(_conv_bn_hswish_kernel, m_total=m, eps=eps)

    out_cm = pl.pallas_call(
        kernel,
        out_shape=jax.ShapeDtypeStruct((cout, m_pad), jnp.float32),
        grid=(2, num_tiles),                                   # (phase, M tiles)
        in_specs=[
            pl.BlockSpec((k, tm), lambda p, i: (0, i)),        # patch columns
            pl.BlockSpec((cout, k), lambda p, i: (0, 0)),      # weights (resident)
            pl.BlockSpec((cout, 1), lambda p, i: (0, 0)),      # gamma
            pl.BlockSpec((cout, 1), lambda p, i: (0, 0)),      # beta
        ],
        out_specs=pl.BlockSpec((cout, tm), lambda p, i: (0, i)),
        scratch_shapes=[pltpu.VMEM((cout, 1), jnp.float32),    # per-channel sum
                        pltpu.VMEM((cout, 1), jnp.float32)],   # per-channel sumsq
        compiler_params=pltpu.CompilerParams(
            # Phase axis must run in order; M axis is a cross-tile BN reduction.
            dimension_semantics=("arbitrary", "arbitrary"),
            vmem_limit_bytes=32 * 1024 * 1024),
    )(patches_t, w_t, gamma2, beta2)

    # (Cout, M) channel-major -> NCHW
    out = out_cm[:, :m].reshape(cout, n, ho, wo)
    return jnp.transpose(out, (1, 0, 2, 3))


def _reference(x_nchw, weight_oihw, gamma, beta, *, stride, padding,
               eps=BN_EPSILON):
    """Pure-JAX reference mirroring the PyTorch forward (bf16 MXU operands,
    f32 accumulation, training-mode BatchNorm with biased variance, HSwish)."""
    xb = x_nchw.astype(jnp.bfloat16).astype(jnp.float32)
    wb = weight_oihw.astype(jnp.bfloat16).astype(jnp.float32)
    conv = jax.lax.conv_general_dilated(
        xb, wb,
        window_strides=(stride, stride),
        padding=((padding, padding), (padding, padding)),
        dimension_numbers=("NCHW", "OIHW", "NCHW"))
    mean = jnp.mean(conv, axis=(0, 2, 3), keepdims=True)
    var = jnp.mean((conv - mean) ** 2, axis=(0, 2, 3), keepdims=True)
    y = (conv - mean) * jax.lax.rsqrt(var + eps)
    y = y * gamma.reshape(1, -1, 1, 1) + beta.reshape(1, -1, 1, 1)
    return y * jnp.clip(y + 3.0, 0.0, 6.0) * (1.0 / 6.0)


if __name__ == "__main__":
    key = jax.random.PRNGKey(0)
    k_x, k_w = jax.random.split(key)

    # ConvBNSwish(C_in=4, C_out=8, kernel_size=3, stride=1, padding=1)
    N, C_in, H, W = 2, 4, 16, 16
    C_out, K, stride, padding = 8, 3, 1, 1

    x = jax.random.normal(k_x, (N, C_in, H, W), dtype=jnp.float32)
    weight = 0.1 * jax.random.normal(k_w, (C_out, C_in, K, K),
                                     dtype=jnp.float32)
    gamma = jnp.ones((C_out,), dtype=jnp.float32)   # BN affine weight init
    beta = jnp.zeros((C_out,), dtype=jnp.float32)   # BN affine bias init

    # block_cols=128 -> 4 tiles over M = N*Ho*Wo = 512, exercising the
    # cross-tile BatchNorm statistics accumulation path (default is 512).
    fwd = jax.jit(functools.partial(conv_bn_swish, stride=stride,
                                    padding=padding, block_cols=128))
    out = jax.block_until_ready(fwd(x, weight, gamma, beta))

    ref = jax.block_until_ready(
        _reference(x, weight, gamma, beta, stride=stride, padding=padding))

    assert out.shape == (N, C_out, H, W)
    assert jnp.allclose(out, ref, atol=1e-3, rtol=1e-3), \
        float(jnp.max(jnp.abs(out - ref)))
    print("KERNEL_OK")
</pallas_src>

<mosaic_0001>
module attributes {stable_mosaic.version = 11 : i64} {
  func.func @_conv_bn_hswish_kernel(%arg0: i32, %arg1: i32, %arg2: memref<36x128xbf16, #tpu.memory_space<vmem>>, %arg3: memref<8x36xbf16, #tpu.memory_space<vmem>>, %arg4: memref<8x1xf32, #tpu.memory_space<vmem>>, %arg5: memref<8x1xf32, #tpu.memory_space<vmem>>, %arg6: memref<8x128xf32, #tpu.memory_space<vmem>>, %arg7: memref<8x1xf32, #tpu.memory_space<vmem>>, %arg8: memref<8x1xf32, #tpu.memory_space<vmem>>) attributes {dimension_semantics = [#tpu.dimension_semantics<arbitrary>, #tpu.dimension_semantics<arbitrary>], iteration_bounds = array<i64: 2, 4>, scalar_prefetch = 0 : i64, scratch_operands = 2 : i64, tpu.core_type = #tpu.core_type<tc>, window_params = [{transform_indices = @transform_0, window_bounds = array<i64: 36, 128>}, {pipeline_mode = #tpu.pipeline_mode<synchronous>, transform_indices = @transform_1, window_bounds = array<i64: 8, 36>}, {pipeline_mode = #tpu.pipeline_mode<synchronous>, transform_indices = @transform_2, window_bounds = array<i64: 8, 1>}, {pipeline_mode = #tpu.pipeline_mode<synchronous>, transform_indices = @transform_3, window_bounds = array<i64: 8, 1>}, {transform_indices = @transform_4, window_bounds = array<i64: 8, 128>}]} {
    %c0 = arith.constant 0 : index
    %c0_0 = arith.constant 0 : index
    %0 = vector.load %arg3[%c0, %c0_0] : memref<8x36xbf16, #tpu.memory_space<vmem>>, vector<8x36xbf16>
    %c0_1 = arith.constant 0 : index
    %c0_2 = arith.constant 0 : index
    %1 = vector.load %arg2[%c0_1, %c0_2] : memref<36x128xbf16, #tpu.memory_space<vmem>>, vector<36x128xbf16>
    %cst = arith.constant dense<0.000000e+00> : vector<8x128xf32>
    %2 = tpu.matmul %0, %1, %cst {dimension_numbers = #tpu.dot_dimension_numbers<[1], [0], [0], [1], [0, 0, 1, 1], [], []>} : vector<8x36xbf16>, vector<36x128xbf16>, vector<8x128xf32> -> vector<8x128xf32>
    %c0_i32 = arith.constant 0 : i32
    %3 = arith.cmpi eq, %arg0, %c0_i32 : i32
    %c0_i32_3 = arith.constant 0 : i32
    %4 = arith.cmpi eq, %arg1, %c0_i32_3 : i32
    %5 = arith.andi %3, %4 : i1
    %6 = arith.extui %5 : i1 to i32
    %c0_i32_4 = arith.constant 0 : i32
    %7 = arith.cmpi ne, %6, %c0_i32_4 : i32
    scf.if %7 {
      %cst_8 = arith.constant 0.000000e+00 : f32
      %14 = vector.broadcast %cst_8 : f32 to vector<8x1xf32>
      %c0_9 = arith.constant 0 : index
      %c0_10 = arith.constant 0 : index
      %15 = vector.load %arg7[%c0_9, %c0_10] : memref<8x1xf32, #tpu.memory_space<vmem>>, vector<8x1xf32>
      tpu.vector_store %arg7[%c0_9, %c0_10], %14 {strides = array<i32>} : memref<8x1xf32, #tpu.memory_space<vmem>>, vector<8x1xf32>,
      %cst_11 = arith.constant 0.000000e+00 : f32
      %16 = vector.broadcast %cst_11 : f32 to vector<8x1xf32>
      %c0_12 = arith.constant 0 : index
      %c0_13 = arith.constant 0 : index
      %17 = vector.load %arg8[%c0_12, %c0_13] : memref<8x1xf32, #tpu.memory_space<vmem>>, vector<8x1xf32>
      tpu.vector_store %arg8[%c0_12, %c0_13], %16 {strides = array<i32>} : memref<8x1xf32, #tpu.memory_space<vmem>>, vector<8x1xf32>,
    } else {
    }
    %c0_i32_5 = arith.constant 0 : i32
    %8 = arith.cmpi eq, %arg0, %c0_i32_5 : i32
    %9 = arith.extui %8 : i1 to i32
    %c0_i32_6 = arith.constant 0 : i32
    %10 = arith.cmpi ne, %9, %c0_i32_6 : i32
    scf.if %10 {
      %c0_8 = arith.constant 0 : index
      %c0_9 = arith.constant 0 : index
      %14 = vector.load %arg7[%c0_8, %c0_9] : memref<8x1xf32, #tpu.memory_space<vmem>>, vector<8x1xf32>
      %cst_10 = arith.constant dense<0.000000e+00> : vector<8xf32>
      %15 = vector.multi_reduction <add>, %2, %cst_10 [1] : vector<8x128xf32> to vector<8xf32>
      %16 = vector.shape_cast %15 : vector<8xf32> to vector<8x1xf32>
      %17 = arith.addf %14, %16 : vector<8x1xf32>
      %c0_11 = arith.constant 0 : index
      %c0_12 = arith.constant 0 : index
      %18 = vector.load %arg7[%c0_11, %c0_12] : memref<8x1xf32, #tpu.memory_space<vmem>>, vector<8x1xf32>
      tpu.vector_store %arg7[%c0_11, %c0_12], %17 {strides = array<i32>} : memref<8x1xf32, #tpu.memory_space<vmem>>, vector<8x1xf32>,
      %c0_13 = arith.constant 0 : index
      %c0_14 = arith.constant 0 : index
      %19 = vector.load %arg8[%c0_13, %c0_14] : memref<8x1xf32, #tpu.memory_space<vmem>>, vector<8x1xf32>
      %20 = arith.mulf %2, %2 : vector<8x128xf32>
      %cst_15 = arith.constant dense<0.000000e+00> : vector<8xf32>
      %21 = vector.multi_reduction <add>, %20, %cst_15 [1] : vector<8x128xf32> to vector<8xf32>
      %22 = vector.shape_cast %21 : vector<8xf32> to vector<8x1xf32>
      %23 = arith.addf %19, %22 : vector<8x1xf32>
      %c0_16 = arith.constant 0 : index
      %c0_17 = arith.constant 0 : index
      %24 = vector.load %arg8[%c0_16, %c0_17] : memref<8x1xf32, #tpu.memory_space<vmem>>, vector<8x1xf32>
      tpu.vector_store %arg8[%c0_16, %c0_17], %23 {strides = array<i32>} : memref<8x1xf32, #tpu.memory_space<vmem>>, vector<8x1xf32>,
      %c0_18 = arith.constant 0 : index
      %c0_19 = arith.constant 0 : index
      %25 = vector.load %arg6[%c0_18, %c0_19] : memref<8x128xf32, #tpu.memory_space<vmem>>, vector<8x128xf32>
      tpu.vector_store %arg6[%c0_18, %c0_19], %2 {strides = array<i32>} : memref<8x128xf32, #tpu.memory_space<vmem>>, vector<8x128xf32>,
    } else {
    }
    %c1_i32 = arith.constant 1 : i32
    %11 = arith.cmpi eq, %arg0, %c1_i32 : i32
    %12 = arith.extui %11 : i1 to i32
    %c0_i32_7 = arith.constant 0 : i32
    %13 = arith.cmpi ne, %12, %c0_i32_7 : i32
    scf.if %13 {
      %c0_8 = arith.constant 0 : index
      %c0_9 = arith.constant 0 : index
      %14 = vector.load %arg7[%c0_8, %c0_9] : memref<8x1xf32, #tpu.memory_space<vmem>>, vector<8x1xf32>
      %cst_10 = arith.constant 0.001953125 : f32
      %15 = vector.broadcast %cst_10 : f32 to vector<8x1xf32>
      %16 = arith.mulf %14, %15 : vector<8x1xf32>
      %c0_11 = arith.constant 0 : index
      %c0_12 = arith.constant 0 : index
      %17 = vector.load %arg8[%c0_11, %c0_12] : memref<8x1xf32, #tpu.memory_space<vmem>>, vector<8x1xf32>
      %cst_13 = arith.constant 0.001953125 : f32
      %18 = vector.broadcast %cst_13 : f32 to vector<8x1xf32>
      %19 = arith.mulf %17, %18 : vector<8x1xf32>
      %20 = arith.mulf %16, %16 : vector<8x1xf32>
      %21 = arith.subf %19, %20 : vector<8x1xf32>
      %cst_14 = arith.constant 1.000000e-03 : f32
      %22 = vector.broadcast %cst_14 : f32 to vector<8x1xf32>
      %23 = arith.addf %21, %22 : vector<8x1xf32>
      %24 = math.rsqrt %23 : vector<8x1xf32>
      %c0_15 = arith.constant 0 : index
      %c0_16 = arith.constant 0 : index
      %25 = vector.load %arg4[%c0_15, %c0_16] : memref<8x1xf32, #tpu.memory_space<vmem>>, vector<8x1xf32>
      %26 = arith.mulf %25, %24 : vector<8x1xf32>
      %c0_17 = arith.constant 0 : index
      %c0_18 = arith.constant 0 : index
      %27 = vector.load %arg5[%c0_17, %c0_18] : memref<8x1xf32, #tpu.memory_space<vmem>>, vector<8x1xf32>
      %28 = arith.mulf %16, %26 : vector<8x1xf32>
      %29 = arith.subf %27, %28 : vector<8x1xf32>
      %30 = vector.broadcast %26 : vector<8x1xf32> to vector<8x128xf32>
      %31 = arith.mulf %2, %30 : vector<8x128xf32>
      %32 = vector.broadcast %29 : vector<8x1xf32> to vector<8x128xf32>
      %33 = arith.addf %31, %32 : vector<8x128xf32>
      %cst_19 = arith.constant 3.000000e+00 : f32
      %34 = vector.broadcast %cst_19 : f32 to vector<8x128xf32>
      %35 = arith.addf %33, %34 : vector<8x128xf32>
      %cst_20 = arith.constant 0.000000e+00 : f32
      %cst_21 = arith.constant 6.000000e+00 : f32
      %36 = vector.broadcast %cst_20 : f32 to vector<8x128xf32>
      %37 = arith.maximumf %36, %35 : vector<8x128xf32>
      %38 = vector.broadcast %cst_21 : f32 to vector<8x128xf32>
      %39 = arith.minimumf %38, %37 : vector<8x128xf32>
      %40 = arith.mulf %33, %39 : vector<8x128xf32>
      %cst_22 = arith.constant 0.166666672 : f32
      %41 = vector.broadcast %cst_22 : f32 to vector<8x128xf32>
      %42 = arith.mulf %40, %41 : vector<8x128xf32>
      %c0_23 = arith.constant 0 : index
      %c0_24 = arith.constant 0 : index
      %43 = vector.load %arg6[%c0_23, %c0_24] : memref<8x128xf32, #tpu.memory_space<vmem>>, vector<8x128xf32>
      tpu.vector_store %arg6[%c0_23, %c0_24], %42 {strides = array<i32>} : memref<8x128xf32, #tpu.memory_space<vmem>>, vector<8x128xf32>,
    } else {
    }
    return
  }
  func.func @transform_0(%arg0: i32, %arg1: i32) -> (i32, i32) {
    %c0_i32 = arith.constant 0 : i32
    %c0_i32_0 = arith.constant 0 : i32
    return %c0_i32, %arg1 : i32, i32
  }
  func.func @transform_1(%arg0: i32, %arg1: i32) -> (i32, i32) {
    %c0_i32 = arith.constant 0 : i32
    %c0_i32_0 = arith.constant 0 : i32
    %c0_i32_1 = arith.constant 0 : i32
    return %c0_i32, %c0_i32_0 : i32, i32
  }
  func.func @transform_2(%arg0: i32, %arg1: i32) -> (i32, i32) {
    %c0_i32 = arith.constant 0 : i32
    %c0_i32_0 = arith.constant 0 : i32
    %c0_i32_1 = arith.constant 0 : i32
    return %c0_i32, %c0_i32_0 : i32, i32
  }
  func.func @transform_3(%arg0: i32, %arg1: i32) -> (i32, i32) {
    %c0_i32 = arith.constant 0 : i32
    %c0_i32_0 = arith.constant 0 : i32
    %c0_i32_1 = arith.constant 0 : i32
    return %c0_i32, %c0_i32_0 : i32, i32
  }
  func.func @transform_4(%arg0: i32, %arg1: i32) -> (i32, i32) {
    %c0_i32 = arith.constant 0 : i32
    %c0_i32_0 = arith.constant 0 : i32
    return %c0_i32, %arg1 : i32, i32
  }
}

</mosaic_0001>

<llo_original>
// kernel: conv_bn_swish.1
$region0: #{conv_bn_swish.1}
  #allocation0 [shape = 'u32[]', space=smem, size = 0x4, offset = 0x4, fixed_abs, tag = 'smem constant byte address 0x4 - core index']
  #allocation1 [shape = 'u32[144,128]{1,0:T(1,128)}', space=vmem, size = 0x12000, scoped, tag = 'internal scratch']
  #allocation2 [shape = 'f32[8,1]{1,0:T(8,128)}', space=vmem, size = 0x1000, scoped, tag = 'scratch operand']
  #allocation3 [shape = 'f32[8,1]{1,0:T(8,128)}', space=vmem, size = 0x1000, scoped, tag = 'scratch operand']
  %s0 = inlined_call_operand.vmem [shape: bf16[36,512], index: 0, kind: input, shape index: {}]
  %s1 = inlined_call_operand.vmem [shape: bf16[8,36], index: 1, kind: input, shape index: {}]
  %s2 = inlined_call_operand.vmem [shape: f32[8,1], index: 2, kind: input, shape index: {}]
  %s3 = inlined_call_operand.vmem [shape: f32[8,1], index: 3, kind: input, shape index: {}]
  %s4 = inlined_call_operand.vmem [shape: f32[8,512], index: 4, kind: output, shape index: {}]
  %s5 = sld [smem:[#allocation0]]
  $region102: #{conv_bn_swish.1} parent=0
    _
  %s7 = ssub.s32 1, %s5
  %s8 = scalar_select 0, %s7, %s5
  $region1: #{conv_bn_swish.1} parent=0
    #allocation4 [shape = 'u8[20480]{0}', space=vmem, size = 0x5000, scoped, tag = 'input window, operand 0']
    loop: start=0, step=1, limit=10
    $region2: #{conv_bn_swish.1} parent=1 // loop_pre_header
      _
    $region3: #{conv_bn_swish.1} parent=1 // loop_header
      %s10 = sphi 0, %s14
      %p11 = scmp.ge.s32.totalorder %s10, 10
      %s17 = sphi 0, %s29
      %s18 = sphi 0, %s25
      %s19 = sphi 0, %s17
      %s20 = sphi 0, %s18
      %s21 = sphi 0, %s19
      %s22 = sphi 0, %s20
      %s32 = sphi 0, %s34
      %s35 = sphi 0, %s32
      %s36 = sphi 0, %s35
      %s52 = sphi 0, %s36
      %s56 = sphi 0, %s56
      %s58 = sphi 0, %s56
      %s59 = sphi 0, %s58
      %s73 = sphi 0, %s59
      %s77 = sphi 0, %s77
      %s79 = sphi 0, %s77
      %s80 = sphi 0, %s79
      %s94 = sphi 0, %s80
      %s98 = sphi 0, %s98
      %s100 = sphi 0, %s98
      %s101 = sphi 0, %s100
      %s115 = sphi 0, %s101
      %s121 = sphi 0, %s123
      %s124 = sphi 0, %s121
      %s125 = sphi 0, %s124
      %s141 = sphi 0, %s125
    $region4: #{conv_bn_swish.1} parent=1 // loop_header_branch
      %13 = sbr.rel (%p11) target = $region8
    $region5: #{conv_bn_swish.1} parent=1 // loop_body
      %s15 = ssub.s32 %s10, 1
      %s16 = ssub.s32 %s10, 2
      %s23 = sadd.s32 1, %s18
      %p24 = scmp.ge.s32.totalorder %s23, 4
      %s25 = scalar_select %p24, 0, %s23
      %s26 = sadd.s32 1, %s17
      %s27 = scalar_select %p24, %s26, %s17
      %p28 = scmp.ge.s32.totalorder %s27, 2
      %s29 = scalar_select %p28, 0, %s27
      %s30 = ssub.s32 %s18, %s25
      %p31 = scmp.eq.s32.totalorder %s30, 0
      %s33 = sadd.s32 %s32, 1
      %s34 = scalar_select %p31, %s32, %s33
      %p37 = pneg %p31
      %p38 = scmp.eq.s32.totalorder %s10, 7
      %p39 = por %p37, %p38
      %p40 = scmp.ne.s32.totalorder %s32, %s35
      %p41 = scmp.eq.s32.totalorder %s10, 0
      %p42 = por %p40, %p41
      %p43 = scmp.ne.s32.totalorder %s32, %s35
      %p44 = scmp.eq.s32.totalorder %s15, 7
      %p45 = por %p43, %p44
      %p46 = scmp.ne.s32.totalorder %s35, %s36
      %p47 = scmp.eq.s32.totalorder %s15, 0
      %p48 = por %p46, %p47
      %p49 = scmp.ne.s32.totalorder %s35, %s36
      %p50 = scmp.eq.s32.totalorder %s16, 7
      %p51 = por %p49, %p50
      %p53 = scmp.ne.s32.totalorder %s36, %s52
      %p54 = scmp.eq.s32.totalorder %s16, 0
      %p55 = por %p53, %p54
      %s57 = sadd.s32 %s56, 1
      %p60 = scmp.eq.s32.totalorder %s10, 7
      %p61 = scmp.ne.s32.totalorder %s56, %s58
      %p62 = scmp.eq.s32.totalorder %s10, 0
      %p63 = por %p61, %p62
      %p64 = scmp.ne.s32.totalorder %s56, %s58
      %p65 = scmp.eq.s32.totalorder %s15, 7
      %p66 = por %p64, %p65
      %p67 = scmp.ne.s32.totalorder %s58, %s59
      %p68 = scmp.eq.s32.totalorder %s15, 0
      %p69 = por %p67, %p68
      %p70 = scmp.ne.s32.totalorder %s58, %s59
      %p71 = scmp.eq.s32.totalorder %s16, 7
      %p72 = por %p70, %p71
      %p74 = scmp.ne.s32.totalorder %s59, %s73
      %p75 = scmp.eq.s32.totalorder %s16, 0
      %p76 = por %p74, %p75
      %s78 = sadd.s32 %s77, 1
      %p81 = scmp.eq.s32.totalorder %s10, 7
      %p82 = scmp.ne.s32.totalorder %s77, %s79
      %p83 = scmp.eq.s32.totalorder %s10, 0
      %p84 = por %p82, %p83
      %p85 = scmp.ne.s32.totalorder %s77, %s79
      %p86 = scmp.eq.s32.totalorder %s15, 7
      %p87 = por %p85, %p86
      %p88 = scmp.ne.s32.totalorder %s79, %s80
      %p89 = scmp.eq.s32.totalorder %s15, 0
      %p90 = por %p88, %p89
      %p91 = scmp.ne.s32.totalorder %s79, %s80
      %p92 = scmp.eq.s32.totalorder %s16, 7
      %p93 = por %p91, %p92
      %p95 = scmp.ne.s32.totalorder %s80, %s94
      %p96 = scmp.eq.s32.totalorder %s16, 0
      %p97 = por %p95, %p96
      %s99 = sadd.s32 %s98, 1
      %p102 = scmp.eq.s32.totalorder %s10, 7
      %p103 = scmp.ne.s32.totalorder %s98, %s100
      %p104 = scmp.eq.s32.totalorder %s10, 0
      %p105 = por %p103, %p104
      %p106 = scmp.ne.s32.totalorder %s98, %s100
      %p107 = scmp.eq.s32.totalorder %s15, 7
      %p108 = por %p106, %p107
      %p109 = scmp.ne.s32.totalorder %s100, %s101
      %p110 = scmp.eq.s32.totalorder %s15, 0
      %p111 = por %p109, %p110
      %p112 = scmp.ne.s32.totalorder %s100, %s101
      %p113 = scmp.eq.s32.totalorder %s16, 7
      %p114 = por %p112, %p113
      %p116 = scmp.ne.s32.totalorder %s101, %s115
      %p117 = scmp.eq.s32.totalorder %s16, 0
      %p118 = por %p116, %p117
      %s119 = ssub.s32 %s18, %s25
      %p120 = scmp.eq.s32.totalorder %s119, 0
      %s122 = sadd.s32 %s121, 1
      %s123 = scalar_select %p120, %s121, %s122
      %p126 = pneg %p120
      %p127 = scmp.eq.s32.totalorder %s10, 7
      %p128 = por %p126, %p127
      %p129 = scmp.ne.s32.totalorder %s121, %s124
      %p130 = scmp.eq.s32.totalorder %s10, 0
      %p131 = por %p129, %p130
      %p132 = scmp.ne.s32.totalorder %s121, %s124
      %p133 = scmp.eq.s32.totalorder %s15, 7
      %p134 = por %p132, %p133
      %p135 = scmp.ne.s32.totalorder %s124, %s125
      %p136 = scmp.eq.s32.totalorder %s15, 0
      %p137 = por %p135, %p136
      %p138 = scmp.ne.s32.totalorder %s124, %s125
      %p139 = scmp.eq.s32.totalorder %s16, 7
      %p140 = por %p138, %p139
      %p142 = scmp.ne.s32.totalorder %s125, %s141
      %p143 = scmp.eq.s32.totalorder %s16, 0
      %p144 = por %p142, %p143
      %p145 = scmp.le.s32.totalorder 1, %s10
      %p146 = scmp.lt.s32.totalorder %s10, 9
      %p147 = pnand %p145, %p146
      %p148 = pneg %p147
      // Predicated region
      $region9: #{conv_bn_swish.1} parent=5 // pred_check
        _
      $region10: #{conv_bn_swish.1} parent=5 // pred_check_branch
        %150 = sbr.rel (%p147) target = $region12
      $region11: #{conv_bn_swish.1} parent=5 // pred_region
        %s151 = ssub.s32 %s10, 1
        // Predicated region
        $region13: #{conv_bn_swish.1} parent=11 // pred_check
          %p152 = pneg %p69
        $region14: #{conv_bn_swish.1} parent=11 // pred_check_branch
          %154 = sbr.rel (%p152) target = $region16
        $region15: #{conv_bn_swish.1} parent=11 // pred_region
          _
        $region16: #{conv_bn_swish.1} parent=11 // pred_fallthru
          _
        // Predicated region
        $region17: #{conv_bn_swish.1} parent=11 // pred_check
          %p155 = pneg %p90
        $region18: #{conv_bn_swish.1} parent=11 // pred_check_branch
          %157 = sbr.rel (%p155) target = $region20
        $region19: #{conv_bn_swish.1} parent=11 // pred_region
          _
        $region20: #{conv_bn_swish.1} parent=11 // pred_fallthru
          _
        // Predicated region
        $region21: #{conv_bn_swish.1} parent=11 // pred_check
          %p158 = pneg %p111
        $region22: #{conv_bn_swish.1} parent=11 // pred_check_branch
          %160 = sbr.rel (%p158) target = $region24
        $region23: #{conv_bn_swish.1} parent=11 // pred_region
          _
        $region24: #{conv_bn_swish.1} parent=11 // pred_fallthru
          _
      $region12: #{conv_bn_swish.1} parent=5 // pred_fallthru
        _
      %p161 = scmp.lt.s32.totalorder %s10, 8
      // Predicated region
      $region25: #{conv_bn_swish.1} parent=5 // pred_check
        %p162 = pneg %p161
      $region26: #{conv_bn_swish.1} parent=5 // pred_check_branch
        %164 = sbr.rel (%p162) target = $region28
      $region27: #{conv_bn_swish.1} parent=5 // pred_region
        // Predicated region
        $region29: #{conv_bn_swish.1} parent=27 // pred_check
          %p165 = pneg %p42
        $region30: #{conv_bn_swish.1} parent=27 // pred_check_branch
          %167 = sbr.rel (%p165) target = $region32
        $region31: #{conv_bn_swish.1} parent=27 // pred_region
          %s168 = sand.u32 %s32, 1
          %s169 = sand.u32 %s32, 1
          %s170 = smul.addr %s169, 20
          %s171 = scalar_lea.vmem [#allocation4], %s170
          %s172 = smul.addr %s18, 4
          %s173 = scalar_lea.vmem %s0, %s172
          // Predicated region
          $region33: #{conv_bn_swish.1} parent=31 // pred_check
            _
          $region34: #{conv_bn_swish.1} parent=31 // pred_check_branch
            %175 = sbr.rel (0) target = $region36
          $region35: #{conv_bn_swish.1} parent=31 // pred_region
            // Predicated region
            $region37: #{conv_bn_swish.1} parent=35 // pred_check
              _
            $region38: #{conv_bn_swish.1} parent=35 // pred_check_branch
              %177 = sbr.rel target = $region40
            $region39: #{conv_bn_swish.1} parent=35 // pred_region
              // Predicated region
              $region52: #{conv_bn_swish.1} parent=39 // pred_check
                _
              $region53: #{conv_bn_swish.1} parent=39 // pred_check_branch
                %200 = sbr.rel (0) target = $region55
              $region54: #{conv_bn_swish.1} parent=39 // pred_region
                loop: start=0, step=1, limit=1
                $region56: #{conv_bn_swish.1} parent=54 // loop_pre_header
                  _
                $region57: #{conv_bn_swish.1} parent=54 // loop_header
                  %s202 = sphi 0, %s206
                  %p203 = scmp.ge.s32.totalorder %s202, 1
                  %s207 = sphi %s173, %s173
                  %s208 = sphi %s171, %s171
                $region58: #{conv_bn_swish.1} parent=54 // loop_header_branch
                  %205 = sbr.rel (%p203) target = $region62
                $region59: #{conv_bn_swish.1} parent=54 // loop_body
                  _
                $region60: #{conv_bn_swish.1} parent=54 // loop_footer
                  %s206 = sadd.s32 1, %s202
                $region61: #{conv_bn_swish.1} parent=54 // loop_footer_branch
                  %201 = sbr.rel target = $region57
                $region62: #{conv_bn_swish.1} parent=54 // loop_exit
                  _
                loop: start=0, step=1, limit=1
                $region63: #{conv_bn_swish.1} parent=54 // loop_pre_header
                  _
                $region64: #{conv_bn_swish.1} parent=54 // loop_header
                  %s211 = sphi 0, %s215
                  %p212 = scmp.ge.s32.totalorder %s211, 1
                  %s216 = sphi %s173, %s173
                  %s217 = sphi %s171, %s171
                $region65: #{conv_bn_swish.1} parent=54 // loop_header_branch
                  %214 = sbr.rel (%p212) target = $region69
                $region66: #{conv_bn_swish.1} parent=54 // loop_body
                  %v218 = vld [vmem:[%s216] sm:$0xf]
                  %219 = vst [vmem:[%s217] sm:$0xf] %v218
                  %v220 = vld [vmem:[%s216 + $0x10] sm:$0xf]
                  %221 = vst [vmem:[%s217 + $0x4] sm:$0xf] %v220
                  %v222 = vld [vmem:[%s216 + $0x20] sm:$0xf]
                  %223 = vst [vmem:[%s217 + $0x8] sm:$0xf] %v222
                  %v224 = vld [vmem:[%s216 + $0x30] sm:$0xf]
                  %225 = vst [vmem:[%s217 + $0xc] sm:$0xf] %v224
                  %v226 = vld [vmem:[%s216 + $0x40] sm:$0xf]
                  %227 = vst [vmem:[%s217 + $0x10] sm:$0xf] %v226
                $region67: #{conv_bn_swish.1} parent=54 // loop_footer
                  %s215 = sadd.s32 1, %s211
                $region68: #{conv_bn_swish.1} parent=54 // loop_footer_branch
                  %210 = sbr.rel target = $region64
                $region69: #{conv_bn_swish.1} parent=54 // loop_exit
                  _
              $region55: #{conv_bn_swish.1} parent=39 // pred_fallthru
                _
            $region40: #{conv_bn_swish.1} parent=35 // pred_fallthru
              _
            // Predicated region
            $region41: #{conv_bn_swish.1} parent=35 // pred_check
              _
            $region42: #{conv_bn_swish.1} parent=35 // pred_check_branch
              %179 = sbr.rel (0) target = $region44
            $region43: #{conv_bn_swish.1} parent=35 // pred_region
              loop: start=0, step=1, limit=1
              $region45: #{conv_bn_swish.1} parent=43 // loop_pre_header
                _
              $region46: #{conv_bn_swish.1} parent=43 // loop_header
                %s182 = sphi 0, %s186
                %p183 = scmp.ge.s32.totalorder %s182, 1
                %s187 = sphi %s173, %s173
                %s188 = sphi %s171, %s171
              $region47: #{conv_bn_swish.1} parent=43 // loop_header_branch
                %185 = sbr.rel (%p183) target = $region51
              $region48: #{conv_bn_swish.1} parent=43 // loop_body
                %v189 = vld [vmem:[%s187] sm:$0xf]
                %190 = vst [vmem:[%s188] sm:$0xf] %v189
                %v191 = vld [vmem:[%s187 + $0x10] sm:$0xf]
                %192 = vst [vmem:[%s188 + $0x4] sm:$0xf] %v191
                %v193 = vld [vmem:[%s187 + $0x20] sm:$0xf]
                %194 = vst [vmem:[%s188 + $0x8] sm:$0xf] %v193
                %v195 = vld [vmem:[%s187 + $0x30] sm:$0xf]
                %196 = vst [vmem:[%s188 + $0xc] sm:$0xf] %v195
                %v197 = vld [vmem:[%s187 + $0x40] sm:$0xf]
                %198 = vst [vmem:[%s188 + $0x10] sm:$0xf] %v197
              $region49: #{conv_bn_swish.1} parent=43 // loop_footer
                %s186 = sadd.s32 1, %s182
              $region50: #{conv_bn_swish.1} parent=43 // loop_footer_branch
                %181 = sbr.rel target = $region46
              $region51: #{conv_bn_swish.1} parent=43 // loop_exit
                _
            $region44: #{conv_bn_swish.1} parent=35 // pred_fallthru
              _
          $region36: #{conv_bn_swish.1} parent=31 // pred_fallthru
            _
          %228 = vnop
        $region32: #{conv_bn_swish.1} parent=27 // pred_fallthru
          _
      $region28: #{conv_bn_swish.1} parent=5 // pred_fallthru
        _
      %p229 = scmp.le.s32.totalorder 1, %s10
      %p230 = scmp.lt.s32.totalorder %s10, 9
      %p231 = pnand %p229, %p230
      %p232 = pneg %p231
      // Predicated region
      $region70: #{conv_bn_swish.1} parent=5 // pred_check
        _
      $region71: #{conv_bn_swish.1} parent=5 // pred_check_branch
        %234 = sbr.rel (%p231) target = $region73
      $region72: #{conv_bn_swish.1} parent=5 // pred_region
        %s235 = ssub.s32 %s10, 1
        %s236 = sand.u32 %s35, 1
        %s237 = sand.u32 %s35, 1
        %s238 = smul.addr %s237, 20
        %s239 = scalar_lea.vmem [#allocation4], %s238
        // Predicated region
        $region74: #{conv_bn_swish.1} parent=72 // pred_check
          %p240 = pneg %p48
        $region75: #{conv_bn_swish.1} parent=72 // pred_check_branch
          %242 = sbr.rel (%p240) target = $region77
        $region76: #{conv_bn_swish.1} parent=72 // pred_region
          _
        $region77: #{conv_bn_swish.1} parent=72 // pred_fallthru
          _
        %s243 = sand.u32 %s35, 1
        %s244 = sand.u32 %s35, 1
        %s245 = smul.addr %s244, 20
        %s246 = scalar_lea.vmem [#allocation4], %s245
        %p247 = pneg %p48
        %p248 = pneg %p45
        %p249 = pneg %p69
        %p250 = pneg %p66
        %p251 = pneg %p90
        %p252 = pneg %p87
        %p253 = pneg %p111
        %p254 = pneg %p108
        %p255 = pneg %p137
        %p256 = pneg %p134
        %p257 = scmp.lt.s32.totalorder %s20, 3
        %s258 = scalar_select %p257, %s20, 3
        %s259 = smul.addr %s258, 8
        %s260 = scalar_lea.vmem %s4, %s259
        %p261 = scmp.lt.s32.totalorder %s20, 3
        %s262 = scalar_select %p261, %s20, 3
        %s263 = smul.addr %s262, 8
        %s264 = scalar_lea.vmem %s4, %s263
        %v266 = vld [vmem:[%s1] sm:$0xf]
        %v267 = vld [vmem:[%s239] sm:$0xf]
        %v268 = vld [vmem:[%s239 + $0x4] sm:$0xf]
        %v269 = vld [vmem:[%s239 + $0x8] sm:$0xf]
        %v270 = vld [vmem:[%s239 + $0xc] sm:$0xf]
        %v271 = vld [vmem:[%s239 + $0x10] sm:$0x3]
        %v277 = vunpack.c.l.b16 %v267
        %v278 = vunpack.c.l.b16 %v268
        %v279 = vunpack.c.l.b16 %v269
        %v280 = vunpack.c.l.b16 %v270
        %v281 = vunpack.c.l.b16 %v271
        %v282 = vpack.c.b16 %v278, %v277
        %v283 = vpack.c.b16 %v280, %v279
        %v284 = vpack.c.b16 %v281, %v281
        %vm287 = vcmask 293888
        %v289 = vsel %vm287, %v266, 0
        %vm291 = vcmask 1041408
        %v293 = vsel %vm291, %v284, 0
        %295 = vmatprep.subr.bf16.mxu0 0
        %296 = vmatpush1.bf16.msra.mxu0 %v282
        %297 = vmatprep.subr.bf16.mxu0 0
        %298 = vmatpush1.bf16.msra.mxu0 %v283
        %299 = vmatprep.subr.bf16.mxu0 0
        %300 = vmatpush1.bf16.msra.mxu0 %v293
        %301 = vmatprep.subr.bf16.mxu0 0
        %302 = vmatpush1.bf16.msra.mxu0 0
        %303 = vmatprep.subr.bf16.mxu0 0
        %304 = vmatpush1.bf16.msra.mxu0 0
        %305 = vmatprep.subr.bf16.mxu0 0
        %306 = vmatpush1.bf16.msra.mxu0 0
        %307 = vmatprep.subr.bf16.mxu0 0
        %308 = vmatpush1.bf16.msra.mxu0 0
        %309 = vmatprep.subr.bf16.mxu0 0
        %310 = vmatpush1.bf16.msra.mxu0 0
        %311 = vmatprep.subr.bf16.mxu0 0
        %312 = vmatpush1.bf16.msra.mxu0 0
        %313 = vmatprep.subr.bf16.mxu0 0
        %314 = vmatpush1.bf16.msra.mxu0 0
        %315 = vmatprep.subr.bf16.mxu0 0
        %316 = vmatpush1.bf16.msra.mxu0 0
        %317 = vmatprep.subr.bf16.mxu0 0
        %318 = vmatpush1.bf16.msra.mxu0 0
        %319 = vmatprep.subr.bf16.mxu0 0
        %320 = vmatpush1.bf16.msra.mxu0 0
        %321 = vmatprep.subr.bf16.mxu0 0
        %322 = vmatpush1.bf16.msra.mxu0 0
        %323 = vmatprep.subr.bf16.mxu0 0
        %324 = vmatpush1.bf16.msra.mxu0 0
        %325 = vmatprep.subr.bf16.mxu0 0
        %326 = vmatpush1.bf16.msra.mxu0 0
        %327 = vmatprep.mubr.bf16.mxu0 0
        %328 = vmatmul.mubr.bf16.gmra.mrb[0].mxu0 %v289
        %v329 = vpop.f32.mrb[0].mxu0
        %v330 = vadd.f32 0.0, %v329
        %v331 = vpop.f32.mrb[0].mxu0
        %v332 = vpop.f32.mrb[0].mxu0
        %v333 = vpop.f32.mrb[0].mxu0
        %334 = vdwg.mxu0
        %p335 = scmp.eq.s32.totalorder %s19, 0
        %p336 = scmp.eq.s32.totalorder %s20, 0
        %p337 = pnand %p335, %p336
        %p338 = pneg %p337
        // Predicated region
        $region78: #{conv_bn_swish.1} parent=72 // pred_check
          _
        $region79: #{conv_bn_swish.1} parent=72 // pred_check_branch
          %340 = sbr.rel (%p337) target = $region81
        $region80: #{conv_bn_swish.1} parent=72 // pred_region
          %vm341 = vcmask 7168
          %342 = vst.msk [vmem:[#allocation2] sm:$0xff] %vm341, 0.0
          %343 = vst.msk [vmem:[#allocation3] sm:$0xff] %vm341, 0.0
        $region81: #{conv_bn_swish.1} parent=72 // pred_fallthru
          _
        // Predicated region
        $region82: #{conv_bn_swish.1} parent=72 // pred_check
          %p344 = pneg %p335
        $region83: #{conv_bn_swish.1} parent=72 // pred_check_branch
          %346 = sbr.rel (%p344) target = $region85
        $region84: #{conv_bn_swish.1} parent=72 // pred_region
          %v347 = vld [vmem:[#allocation2] sm:$0xff]
          %348 = vadd.xlane.f32.xlu0 %v330
          %v349 = vpop.xlane.xlu0 %348
          %v350 = vadd.f32 %v347, %v349
          %vm351 = vcmask 7168
          %352 = vst.msk [vmem:[#allocation2] sm:$0xff] %vm351, %v350
          %v353 = vld [vmem:[#allocation3] sm:$0xff]
          %v354 = vmul.f32 %v330, %v330
          %355 = vadd.xlane.f32.xlu0 %v354
          %v356 = vpop.xlane.xlu0 %355
          %v357 = vadd.f32 %v353, %v356
          %358 = vst.msk [vmem:[#allocation3] sm:$0xff] %vm351, %v357
          %359 = vst [vmem:[%s264] sm:$0xff] %v330
        $region85: #{conv_bn_swish.1} parent=72 // pred_fallthru
          _
        %p360 = scmp.eq.s32.totalorder %s19, 1
        // Predicated region
        $region86: #{conv_bn_swish.1} parent=72 // pred_check
          %p361 = pneg %p360
        $region87: #{conv_bn_swish.1} parent=72 // pred_check_branch
          %363 = sbr.rel (%p361) target = $region89
        $region88: #{conv_bn_swish.1} parent=72 // pred_region
          %v364 = vld [vmem:[#allocation2] sm:$0xff]
          %v365 = vmul.f32 %v364, 0.001953125
          %v366 = vld [vmem:[#allocation3] sm:$0xff]
          %v367 = vmul.f32 %v366, 0.001953125
          %v368 = vmul.f32 %v365, %v365
          %v369 = vsub.f32 %v367, %v368
          %v370 = vadd.f32 %v369, 0.001
          %v371 = vrsqrt.pop %v370
          %v372 = vld [vmem:[%s2] sm:$0xff]
          %v373 = vmul.f32 %v372, %v371
          %v374 = vld [vmem:[%s3] sm:$0xff]
          %v375 = vmul.f32 %v365, %v373
          %v376 = vsub.f32 %v374, %v375
          %378 = vset.pattern.permute.xlu0 0
          %379 = vperm.xlu0 %378, %v373
          %v380 = vpop.permute.xlu0 %379
          %v382 = vmul.f32 %v330, %v380
          %384 = vset.pattern.permute.xlu0 0
          %385 = vperm.xlu0 %384, %v376
          %v386 = vpop.permute.xlu0 %385
          %v388 = vadd.f32 %v382, %v386
          %v389 = vadd.f32 %v388, 3.0
          %v390 = vmax.f32 %v389, 0.0
          %v391 = vmin.f32 %v390, 6.0
          %v392 = vmul.f32 %v388, %v391
          %v393 = vmul.f32 %v392, 0.16666667
          %394 = vst [vmem:[%s264] sm:$0xff] %v393
        $region89: #{conv_bn_swish.1} parent=72 // pred_fallthru
          _
        %p395 = scmp.lt.s32.totalorder %s20, 3
        %s396 = scalar_select %p395, %s20, 3
        %s397 = smul.addr %s396, 8
        %s398 = scalar_lea.vmem %s4, %s397
        // Predicated region
        $region90: #{conv_bn_swish.1} parent=72 // pred_check
          %p399 = pneg %p134
        $region91: #{conv_bn_swish.1} parent=72 // pred_check_branch
          %401 = sbr.rel (%p399) target = $region93
        $region92: #{conv_bn_swish.1} parent=72 // pred_region
          _
        $region93: #{conv_bn_swish.1} parent=72 // pred_fallthru
          _
      $region73: #{conv_bn_swish.1} parent=5 // pred_fallthru
        _
      %p402 = scmp.le.s32.totalorder 2, %s10
      // Predicated region
      $region94: #{conv_bn_swish.1} parent=5 // pred_check
        %p403 = pneg %p402
      $region95: #{conv_bn_swish.1} parent=5 // pred_check_branch
        %405 = sbr.rel (%p403) target = $region97
      $region96: #{conv_bn_swish.1} parent=5 // pred_region
        %s406 = ssub.s32 %s10, 2
        // Predicated region
        $region98: #{conv_bn_swish.1} parent=96 // pred_check
          %p407 = pneg %p140
        $region99: #{conv_bn_swish.1} parent=96 // pred_check_branch
          %409 = sbr.rel (%p407) target = $region101
        $region100: #{conv_bn_swish.1} parent=96 // pred_region
          %p410 = scmp.lt.s32.totalorder %s22, 3
          %s411 = scalar_select %p410, %s22, 3
          %s412 = smul.addr %s411, 8
          %s413 = scalar_lea.vmem %s4, %s412
        $region101: #{conv_bn_swish.1} parent=96 // pred_fallthru
          _
      $region97: #{conv_bn_swish.1} parent=5 // pred_fallthru
        _
    $region6: #{conv_bn_swish.1} parent=1 // loop_footer
      %s14 = sadd.s32 1, %s10
    $region7: #{conv_bn_swish.1} parent=1 // loop_footer_branch
      %9 = sbr.rel target = $region3
    $region8: #{conv_bn_swish.1} parent=1 // loop_exit
      _

</llo_original>
